<compile_context>
chip_gen: v7x
topology: tpu7x:2x2x1
jax: 0.10.0
libtpu: 0.0.40
codegen_flags: <defaults>
</compile_context>

<pallas_src>
import jax
import jax.numpy as jnp
from jax.experimental import pallas as pl
from jax.experimental.pallas import tpu as pltpu


def _abs_pos_emb_kernel(q_ref, emb_ref, o_ref):
    # q_ref:   (tm, d)   VMEM
    # emb_ref: (tn, d)   VMEM (resident across the inner row axis)
    # o_ref:   (tm, tn)  VMEM
    # einsum('i d, j d -> i j') on the MXU, contracting the last dims of both
    # operands directly (no transpose of the embedding tile).
    out = jax.lax.dot_general(
        q_ref[...], emb_ref[...],
        dimension_numbers=(((1,), (1,)), ((), ())),
        preferred_element_type=jnp.float32,
    )
    o_ref[...] = out.astype(o_ref.dtype)


def _round_up(x, m):
    return (x + m - 1) // m * m


def abs_pos_emb_1d(q, abs_pos_emb, *, block_rows=512, block_cols=2048):
    """q: [b, h, i, d]; abs_pos_emb: [j, d] -> [b, h, i, j]"""
    b, h, tokens_i, dim_head = q.shape
    tokens_j, d2 = abs_pos_emb.shape
    assert d2 == dim_head

    # Flatten (b, h, i) into one row dimension; emb is shared across b and h.
    m_rows = b * h * tokens_i
    q2 = q.reshape(m_rows, dim_head)

    # Row tile: sublane-aligned; big blocks for large problems.  No host-side
    # padding -- the grid uses cdiv and the boundary block is masked by Pallas.
    tm = min(block_rows, _round_up(m_rows, 8))

    # Column tile: full extent (always legal as a block dim) when the output
    # tile fits comfortably in VMEM, otherwise a large lane-dense tile.
    tn = tokens_j if tokens_j <= block_cols else block_cols

    # Columns on the OUTER grid axis: each embedding tile is loaded once and
    # reused across every row block (it is the operand shared by all rows).
    grid = (pl.cdiv(tokens_j, tn), pl.cdiv(m_rows, tm))

    itemsize = q2.dtype.itemsize
    cost = pl.CostEstimate(
        flops=2 * m_rows * tokens_j * dim_head,
        transcendentals=0,
        bytes_accessed=(m_rows * dim_head * itemsize
                        + tokens_j * dim_head * abs_pos_emb.dtype.itemsize
                        + m_rows * tokens_j * itemsize),
    )

    out = pl.pallas_call(
        _abs_pos_emb_kernel,
        out_shape=jax.ShapeDtypeStruct((m_rows, tokens_j), q.dtype),
        grid_spec=pltpu.PrefetchScalarGridSpec(
            num_scalar_prefetch=0,
            grid=grid,
            in_specs=[
                pl.BlockSpec((tm, dim_head), lambda c, r: (r, 0)),
                pl.BlockSpec((tn, dim_head), lambda c, r: (c, 0)),
            ],
            out_specs=pl.BlockSpec((tm, tn), lambda c, r: (r, c)),
        ),
        compiler_params=pltpu.CompilerParams(
            dimension_semantics=("parallel", "parallel")),
        cost_estimate=cost,
    )(q2, abs_pos_emb)

    return out.reshape(b, h, tokens_i, tokens_j)


if __name__ == "__main__":
    key = jax.random.PRNGKey(0)
    kq, kemb, kq2, kemb2, kq3, kemb3 = jax.random.split(key, 6)

    # --- Small shapes consistent with the module -------------------------
    batch, heads, tokens, dim_head = 2, 4, 8, 32
    q = jax.random.normal(kq, (batch, heads, tokens, dim_head), dtype=jnp.float32)
    scale = dim_head ** (-0.5)
    abs_pos_emb = jax.random.normal(
        kemb, (tokens, dim_head), dtype=jnp.float32) * scale

    out = abs_pos_emb_1d(q, abs_pos_emb)
    out = jax.block_until_ready(out)
    ref = jnp.einsum('bhid,jd->bhij', q, abs_pos_emb)
    assert out.shape == (batch, heads, tokens, tokens)
    assert jnp.allclose(out, ref, atol=1e-5, rtol=1e-5)

    # --- Tiled (lane-dense) path ------------------------------------------
    b2, h2, t2, d2 = 2, 2, 256, 64
    q_big = jax.random.normal(kq2, (b2, h2, t2, d2), dtype=jnp.float32)
    emb_big = jax.random.normal(kemb2, (t2, d2), dtype=jnp.float32) * (d2 ** -0.5)

    out_big = abs_pos_emb_1d(q_big, emb_big)
    out_big = jax.block_until_ready(out_big)
    ref_big = jnp.einsum('bhid,jd->bhij', q_big, emb_big)
    assert out_big.shape == (b2, h2, t2, t2)
    assert jnp.allclose(out_big, ref_big, atol=1e-4, rtol=1e-4)

    # --- Non-divisible row count: exercises the masked boundary block ------
    b3, h3, t3, d3 = 2, 2, 200, 64   # m_rows = 800, tm = 512 -> partial block
    q_odd = jax.random.normal(kq3, (b3, h3, t3, d3), dtype=jnp.float32)
    emb_odd = jax.random.normal(kemb3, (t3, d3), dtype=jnp.float32) * (d3 ** -0.5)

    out_odd = abs_pos_emb_1d(q_odd, emb_odd)
    out_odd = jax.block_until_ready(out_odd)
    ref_odd = jnp.einsum('bhid,jd->bhij', q_odd, emb_odd)
    assert out_odd.shape == (b3, h3, t3, t3)
    assert jnp.allclose(out_odd, ref_odd, atol=1e-4, rtol=1e-4)

    print("KERNEL_OK")
</pallas_src>

<mosaic_0001>
module attributes {stable_mosaic.version = 11 : i64} {
  func.func @_abs_pos_emb_kernel(%arg0: i32, %arg1: i32, %arg2: memref<64x32xf32, #tpu.memory_space<vmem>>, %arg3: memref<8x32xf32, #tpu.memory_space<vmem>>, %arg4: memref<64x8xf32, #tpu.memory_space<vmem>>) attributes {dimension_semantics = [#tpu.dimension_semantics<parallel>, #tpu.dimension_semantics<parallel>], iteration_bounds = array<i64: 1, 1>, scalar_prefetch = 0 : i64, scratch_operands = 0 : i64, tpu.core_type = #tpu.core_type<tc>, window_params = [{transform_indices = @transform_0, window_bounds = array<i64: 64, 32>}, {transform_indices = @transform_1, window_bounds = array<i64: 8, 32>}, {transform_indices = @transform_2, window_bounds = array<i64: 64, 8>}]} {
    %c0 = arith.constant 0 : index
    %c0_0 = arith.constant 0 : index
    %0 = vector.load %arg2[%c0, %c0_0] : memref<64x32xf32, #tpu.memory_space<vmem>>, vector<64x32xf32>
    %c0_1 = arith.constant 0 : index
    %c0_2 = arith.constant 0 : index
    %1 = vector.load %arg3[%c0_1, %c0_2] : memref<8x32xf32, #tpu.memory_space<vmem>>, vector<8x32xf32>
    %cst = arith.constant dense<0.000000e+00> : vector<64x8xf32>
    %2 = tpu.matmul %0, %1, %cst {dimension_numbers = #tpu.dot_dimension_numbers<[1], [1], [0], [0], [0, 0, 1, 0], [], []>} : vector<64x32xf32>, vector<8x32xf32>, vector<64x8xf32> -> vector<64x8xf32>
    %c0_3 = arith.constant 0 : index
    %c0_4 = arith.constant 0 : index
    %3 = vector.load %arg4[%c0_3, %c0_4] : memref<64x8xf32, #tpu.memory_space<vmem>>, vector<64x8xf32>
    tpu.vector_store %arg4[%c0_3, %c0_4], %2 {strides = array<i32>} : memref<64x8xf32, #tpu.memory_space<vmem>>, vector<64x8xf32>,
    return
  }
  func.func @transform_0(%arg0: i32, %arg1: i32) -> (i32, i32) {
    %c0_i32 = arith.constant 0 : i32
    %c0_i32_0 = arith.constant 0 : i32
    return %arg1, %c0_i32 : i32, i32
  }
  func.func @transform_1(%arg0: i32, %arg1: i32) -> (i32, i32) {
    %c0_i32 = arith.constant 0 : i32
    %c0_i32_0 = arith.constant 0 : i32
    return %arg0, %c0_i32 : i32, i32
  }
  func.func @transform_2(%arg0: i32, %arg1: i32) -> (i32, i32) {
    %c0_i32 = arith.constant 0 : i32
    return %arg1, %arg0 : i32, i32
  }
}

</mosaic_0001>

<llo_original>
// kernel: tpu_custom_call.1
$region0: #{tpu_custom_call.1}
  #allocation0 [shape = 'u32[]', space=smem, size = 0x4, offset = 0x4, fixed_abs, tag = 'smem constant byte address 0x4 - core index']
  #allocation1 [shape = 'u32[144,128]{1,0:T(1,128)}', space=vmem, size = 0x12000, scoped, tag = 'internal scratch']
  %s0 = inlined_call_operand.vmem [shape: f32[64,32], index: 0, kind: input, shape index: {}]
  %s1 = inlined_call_operand.vmem [shape: f32[8,32], index: 1, kind: input, shape index: {}]
  %s2 = inlined_call_operand.vmem [shape: f32[64,8], index: 2, kind: output, shape index: {}]
  %s3 = sld [smem:[#allocation0]]
  $region18: #{tpu_custom_call.1} parent=0
    _
  %s5 = ssub.s32 1, %s3
  %s6 = scalar_select 0, %s5, %s3
  // Predicated region
  $region2: #{tpu_custom_call.1} parent=0 // pred_check
    _
  $region3: #{tpu_custom_call.1} parent=0 // pred_check_branch
    %8 = sbr.rel (0) target = $region5
  $region4: #{tpu_custom_call.1} parent=0 // pred_region
    _
  $region5: #{tpu_custom_call.1} parent=0 // pred_fallthru
    _
  // Predicated region
  $region6: #{tpu_custom_call.1} parent=0 // pred_check
    _
  $region7: #{tpu_custom_call.1} parent=0 // pred_check_branch
    %10 = sbr.rel (0) target = $region9
  $region8: #{tpu_custom_call.1} parent=0 // pred_region
    _
  $region9: #{tpu_custom_call.1} parent=0 // pred_fallthru
    _
  %v11 = vld [vmem:[%s0] sm:$0xff]
  %v12 = vld [vmem:[%s0 + $0x8] sm:$0xff]
  %v13 = vld [vmem:[%s0 + $0x10] sm:$0xff]
  %v14 = vld [vmem:[%s0 + $0x18] sm:$0xff]
  %v15 = vld [vmem:[%s0 + $0x20] sm:$0xff]
  %v16 = vld [vmem:[%s0 + $0x28] sm:$0xff]
  %v17 = vld [vmem:[%s0 + $0x30] sm:$0xff]
  %v18 = vld [vmem:[%s0 + $0x38] sm:$0xff]
  %v19 = vld [vmem:[%s1] sm:$0xff]
  %vm20 = vcmask 261120
  %v22 = vsel %vm20, %v11, 0
  %v25 = vsel %vm20, %v12, 0
  %v28 = vsel %vm20, %v13, 0
  %v31 = vsel %vm20, %v14, 0
  %v34 = vsel %vm20, %v15, 0
  %v37 = vsel %vm20, %v16, 0
  %v40 = vsel %vm20, %v17, 0
  %v43 = vsel %vm20, %v18, 0
  %v46 = vsel %vm20, %v19, 0
  %48 = vmatprep.subr.mxu0 0.0
  %49 = vmatpush1.xpose.msra.mxu0 %v46
  %50 = vmatprep.subr.mxu0 0.0
  %51 = vmatpush1.xpose.msra.mxu0 0.0
  %52 = vmatprep.subr.mxu0 0.0
  %53 = vmatpush1.xpose.msra.mxu0 0.0
  %54 = vmatprep.subr.mxu0 0.0
  %55 = vmatpush1.xpose.msra.mxu0 0.0
  %56 = vmatprep.subr.mxu0 0.0
  %57 = vmatpush1.xpose.msra.mxu0 0.0
  %58 = vmatprep.subr.mxu0 0.0
  %59 = vmatpush1.xpose.msra.mxu0 0.0
  %60 = vmatprep.subr.mxu0 0.0
  %61 = vmatpush1.xpose.msra.mxu0 0.0
  %62 = vmatprep.subr.mxu0 0.0
  %63 = vmatpush1.xpose.msra.mxu0 0.0
  %64 = vmatprep.subr.mxu0 0.0
  %65 = vmatpush1.xpose.msra.mxu0 0.0
  %66 = vmatprep.subr.mxu0 0.0
  %67 = vmatpush1.xpose.msra.mxu0 0.0
  %68 = vmatprep.subr.mxu0 0.0
  %69 = vmatpush1.xpose.msra.mxu0 0.0
  %70 = vmatprep.subr.mxu0 0.0
  %71 = vmatpush1.xpose.msra.mxu0 0.0
  %72 = vmatprep.subr.mxu0 0.0
  %73 = vmatpush1.xpose.msra.mxu0 0.0
  %74 = vmatprep.subr.mxu0 0.0
  %75 = vmatpush1.xpose.msra.mxu0 0.0
  %76 = vmatprep.subr.mxu0 0.0
  %77 = vmatpush1.xpose.msra.mxu0 0.0
  %78 = vmatprep.subr.mxu0 0.0
  %79 = vmatpush1.xpose.msra.mxu0 0.0
  %80 = vmatprep.subr.mxu0 0.0
  %81 = vmatpush1.xpose.msra.mxu0 0.0
  %82 = vmatprep.subr.mxu0 0.0
  %83 = vmatpush1.xpose.msra.mxu0 0.0
  %84 = vmatprep.subr.mxu0 0.0
  %85 = vmatpush1.xpose.msra.mxu0 0.0
  %86 = vmatprep.subr.mxu0 0.0
  %87 = vmatpush1.xpose.msra.mxu0 0.0
  %88 = vmatprep.subr.mxu0 0.0
  %89 = vmatpush1.xpose.msra.mxu0 0.0
  %90 = vmatprep.subr.mxu0 0.0
  %91 = vmatpush1.xpose.msra.mxu0 0.0
  %92 = vmatprep.subr.mxu0 0.0
  %93 = vmatpush1.xpose.msra.mxu0 0.0
  %94 = vmatprep.subr.mxu0 0.0
  %95 = vmatpush1.xpose.msra.mxu0 0.0
  %96 = vmatprep.subr.mxu0 0.0
  %97 = vmatpush1.xpose.msra.mxu0 0.0
  %98 = vmatprep.subr.mxu0 0.0
  %99 = vmatpush1.xpose.msra.mxu0 0.0
  %100 = vmatprep.subr.mxu0 0.0
  %101 = vmatpush1.xpose.msra.mxu0 0.0
  %102 = vmatprep.subr.mxu0 0.0
  %103 = vmatpush1.xpose.msra.mxu0 0.0
  %104 = vmatprep.subr.mxu0 0.0
  %105 = vmatpush1.xpose.msra.mxu0 0.0
  %106 = vmatprep.subr.mxu0 0.0
  %107 = vmatpush1.xpose.msra.mxu0 0.0
  %108 = vmatprep.subr.mxu0 0.0
  %109 = vmatpush1.xpose.msra.mxu0 0.0
  %110 = vmatprep.subr.mxu0 0.0
  %111 = vmatpush1.xpose.msra.mxu0 0.0
  %112 = vmatprep.mubr.f32.mxu0 0.0
  %113 = vmatmul.mubr.f32.gmra.mrb[0].mxu0 %v22
  %v114 = vpop.f32.mrb[0].mxu0
  %v115 = vadd.f32 0.0, %v114
  %v116 = vpop.f32.mrb[0].mxu0
  %117 = vmatprep.mubr.f32.mxu0 0.0
  %118 = vmatmul.mubr.f32.gmra.mrb[0].mxu0 %v25
  %v119 = vpop.f32.mrb[0].mxu0
  %v120 = vadd.f32 0.0, %v119
  %v121 = vpop.f32.mrb[0].mxu0
  %122 = vmatprep.mubr.f32.mxu0 0.0
  %123 = vmatmul.mubr.f32.gmra.mrb[0].mxu0 %v28
  %v124 = vpop.f32.mrb[0].mxu0
  %v125 = vadd.f32 0.0, %v124
  %v126 = vpop.f32.mrb[0].mxu0
  %127 = vmatprep.mubr.f32.mxu0 0.0
  %128 = vmatmul.mubr.f32.gmra.mrb[0].mxu0 %v31
  %v129 = vpop.f32.mrb[0].mxu0
  %v130 = vadd.f32 0.0, %v129
  %v131 = vpop.f32.mrb[0].mxu0
  %132 = vmatprep.mubr.f32.mxu0 0.0
  %133 = vmatmul.mubr.f32.gmra.mrb[0].mxu0 %v34
  %v134 = vpop.f32.mrb[0].mxu0
  %v135 = vadd.f32 0.0, %v134
  %v136 = vpop.f32.mrb[0].mxu0
  %137 = vmatprep.mubr.f32.mxu0 0.0
  %138 = vmatmul.mubr.f32.gmra.mrb[0].mxu0 %v37
  %v139 = vpop.f32.mrb[0].mxu0
  %v140 = vadd.f32 0.0, %v139
  %v141 = vpop.f32.mrb[0].mxu0
  %142 = vmatprep.mubr.f32.mxu0 0.0
  %143 = vmatmul.mubr.f32.gmra.mrb[0].mxu0 %v40
  %v144 = vpop.f32.mrb[0].mxu0
  %v145 = vadd.f32 0.0, %v144
  %v146 = vpop.f32.mrb[0].mxu0
  %147 = vmatprep.mubr.f32.mxu0 0.0
  %148 = vmatmul.mubr.f32.gmra.mrb[0].mxu0 %v43
  %v149 = vpop.f32.mrb[0].mxu0
  %v150 = vadd.f32 0.0, %v149
  %v151 = vpop.f32.mrb[0].mxu0
  %152 = vdwg.mxu0
  %vm153 = vcmask 64512
  %154 = vst.msk [vmem:[%s2] sm:$0xff] %vm153, %v115
  %155 = vst.msk [vmem:[%s2 + $0x8] sm:$0xff] %vm153, %v120
  %156 = vst.msk [vmem:[%s2 + $0x10] sm:$0xff] %vm153, %v125
  %157 = vst.msk [vmem:[%s2 + $0x18] sm:$0xff] %vm153, %v130
  %158 = vst.msk [vmem:[%s2 + $0x20] sm:$0xff] %vm153, %v135
  %159 = vst.msk [vmem:[%s2 + $0x28] sm:$0xff] %vm153, %v140
  %160 = vst.msk [vmem:[%s2 + $0x30] sm:$0xff] %vm153, %v145
  %161 = vst.msk [vmem:[%s2 + $0x38] sm:$0xff] %vm153, %v150
  // Predicated region
  $region10: #{tpu_custom_call.1} parent=0 // pred_check
    _
  $region11: #{tpu_custom_call.1} parent=0 // pred_check_branch
    %163 = sbr.rel (0) target = $region13
  $region12: #{tpu_custom_call.1} parent=0 // pred_region
    _
  $region13: #{tpu_custom_call.1} parent=0 // pred_fallthru
    _
  // Predicated region
  $region14: #{tpu_custom_call.1} parent=0 // pred_check
    _
  $region15: #{tpu_custom_call.1} parent=0 // pred_check_branch
    %165 = sbr.rel (0) target = $region17
  $region16: #{tpu_custom_call.1} parent=0 // pred_region
    _
  $region17: #{tpu_custom_call.1} parent=0 // pred_fallthru
    _

</llo_original>
